<compile_context>
chip_gen: v5e
topology: v5e:2x2
jax: 0.10.0
libtpu: 0.0.40
codegen_flags: <defaults>
</compile_context>

<pallas_src>
import jax
import jax.numpy as jnp
from jax.experimental import pallas as pl
from jax.experimental.pallas import tpu as pltpu

K_NEIGHBORS = 10          # k in compute_normals
K1 = K_NEIGHBORS + 1      # KDTree query uses k + 1 (includes the point itself)
SENTINEL = 1.0e6          # far-away coordinate for padded rows (never selected as neighbor)


# ----------------------------------------------------------------------------- helpers

def _round_up(n, m):
    return ((n + m - 1) // m) * m


def _pick_tile(n_pad, candidates):
    for t in candidates:
        if n_pad % t == 0:
            return t
    return n_pad


def _pad_rows(x, n_pad, value=0.0):
    x = x.astype(jnp.float32)
    n = x.shape[0]
    if n_pad == n:
        return x
    pad = jnp.full((n_pad - n,) + x.shape[1:], value, jnp.float32)
    return jnp.concatenate([x, pad], axis=0)


# ----------------------------------------------------------------------------- kernels

def _preprocess_kernel(internal_ref, sdf_ref, xsup_ref, ysup_ref):
    a = internal_ref[...]                                  # (tm, C_int)
    s = sdf_ref[...]                                       # (tm, 4)
    # x_sup = concat(x_internal, sdf_internal[:, 3:4])
    xsup_ref[...] = jnp.concatenate([a[:, 0:3], s[:, 3:4]], axis=-1)
    # y_internal = internal[:, 3:], with the original column 4 shifted by -0.5
    ysup_ref[...] = jnp.concatenate(
        [a[:, 3:4], a[:, 4:5] - jnp.float32(0.5), a[:, 5:]], axis=-1)


def _pdist_kernel(xr_ref, xt_ref, d_ref):
    # xr: (tm, 3) row tile of points; xt: (3, tn) column tile, channel-major (lane-dense).
    # d[i, j] = |x_i - x_j|^2 computed as sum of per-channel squared differences (VPU only,
    # exact and >= 0 -> no clamp needed, no ties from catastrophic cancellation).
    xr = xr_ref[...]
    xt = xt_ref[...]
    d0 = xr[:, 0:1] - xt[0:1, :]
    acc = d0 * d0
    for c in (1, 2):                                       # unrolled, 3 channels
        dc = xr[:, c:c + 1] - xt[c:c + 1, :]
        acc = acc + dc * dc
    d_ref[...] = acc


def _cov_kernel(nbr_ref, cov_ref):
    # nbr: (3, K1, tn) neighborhood coordinates, channel-major, N on the lane axis.
    # Output: (8, tn) lane-dense rows [xx, xy, xz, yy, yz, zz, 0, 0].
    v = nbr_ref[...]
    tn = v.shape[-1]
    inv_k1 = jnp.float32(1.0 / K1)
    inv_km1 = jnp.float32(1.0 / (K1 - 1))                  # np.cov divides by (n - 1)

    # mean-center each channel (unrolled VPU accumulation over K1 sublanes)
    chans = []
    for c in range(3):
        a = v[c]                                           # (K1, tn)
        m = a[0:1, :]
        for k in range(1, K1):
            m = m + a[k:k + 1, :]
        chans.append(a - m * inv_k1)
    cx, cy, cz = chans

    def dot(a, b):
        acc = a[0:1, :] * b[0:1, :]
        for k in range(1, K1):
            acc = acc + a[k:k + 1, :] * b[k:k + 1, :]
        return acc * inv_km1                               # (1, tn)

    zero = jnp.zeros((1, tn), jnp.float32)
    cov_ref[...] = jnp.concatenate(
        [dot(cx, cx), dot(cx, cy), dot(cx, cz),
         dot(cy, cy), dot(cy, cz), dot(cz, cz), zero, zero], axis=0)


# ----------------------------------------------------------------------------- wrappers

def preprocess_internal(internal, sdf):
    n, c = internal.shape
    cs = sdf.shape[1]
    n_pad = _round_up(max(n, 8), 8)
    tm = _pick_tile(n_pad, (1024, 512, 256, 128, 64, 32, 16, 8))
    internal_p = _pad_rows(internal, n_pad)
    sdf_p = _pad_rows(sdf, n_pad)
    xsup, ysup = pl.pallas_call(
        _preprocess_kernel,
        grid=(n_pad // tm,),
        in_specs=[pl.BlockSpec((tm, c), lambda i: (i, 0)),
                  pl.BlockSpec((tm, cs), lambda i: (i, 0))],
        out_specs=(pl.BlockSpec((tm, 4), lambda i: (i, 0)),
                   pl.BlockSpec((tm, c - 3), lambda i: (i, 0))),
        out_shape=(jax.ShapeDtypeStruct((n_pad, 4), jnp.float32),
                   jax.ShapeDtypeStruct((n_pad, c - 3), jnp.float32)),
        compiler_params=pltpu.CompilerParams(dimension_semantics=("parallel",)),
    )(internal_p, sdf_p)
    return xsup[:n], ysup[:n]


def pairwise_sqdist(points_pad):
    # points_pad: (n_pad, 3), n_pad a multiple of 128.
    n_pad, _ = points_pad.shape
    tm = 256 if n_pad % 256 == 0 else 128
    tn = 256 if n_pad % 256 == 0 else 128
    pts_t = points_pad.T                                   # (3, n_pad), lane-dense columns
    return pl.pallas_call(
        _pdist_kernel,
        grid=(n_pad // tm, n_pad // tn),
        in_specs=[pl.BlockSpec((tm, 3), lambda i, j: (i, 0)),
                  pl.BlockSpec((3, tn), lambda i, j: (0, j))],
        out_specs=pl.BlockSpec((tm, tn), lambda i, j: (i, j)),
        out_shape=jax.ShapeDtypeStruct((n_pad, n_pad), jnp.float32),
        compiler_params=pltpu.CompilerParams(
            dimension_semantics=("parallel", "parallel")),
    )(points_pad, pts_t)


def neighborhood_cov(neigh_t):
    # neigh_t: (3, K1, n_pad) channel-major neighborhood coordinates.
    _, k1, n_pad = neigh_t.shape
    tn = _pick_tile(n_pad, (512, 256, 128))
    return pl.pallas_call(
        _cov_kernel,
        grid=(n_pad // tn,),
        in_specs=[pl.BlockSpec((3, k1, tn), lambda i: (0, 0, i))],
        out_specs=pl.BlockSpec((8, tn), lambda i: (0, i)),
        out_shape=jax.ShapeDtypeStruct((8, n_pad), jnp.float32),
        compiler_params=pltpu.CompilerParams(dimension_semantics=("parallel",)),
    )(neigh_t)


def compute_normals(points, k=K_NEIGHBORS):
    """JAX/Pallas equivalent of Read_Data.compute_normals (exact KNN via pdist + top_k)."""
    points = points.astype(jnp.float32)
    n = points.shape[0]
    n_pad = _round_up(max(n, 128), 128)
    points_pad = _pad_rows(points, n_pad, value=SENTINEL)  # sentinels are never neighbors

    d = pairwise_sqdist(points_pad)                        # (n_pad, n_pad)
    # TODO(synk): fuse the per-row top-(k+1) selection into the pdist row loop so the full
    #             N x N matrix never hits HBM; currently done with XLA top_k.
    _, idx = jax.lax.top_k(-d, k + 1)                      # (n_pad, k+1), incl. the point itself
    # TODO(synk): fuse this gather into the cov kernel via scalar-prefetched indices /
    #             in-kernel DMA gather to avoid the (N, k+1, 3) HBM round-trip.
    neigh = points_pad[idx]                                # (n_pad, k+1, 3)
    neigh_t = jnp.transpose(neigh, (2, 1, 0))              # (3, k+1, n_pad) lane-dense

    cov_rows = neighborhood_cov(neigh_t)                   # (8, n_pad): xx xy xz yy yz zz 0 0
    xx, xy, xz, yy, yz, zz = (cov_rows[i] for i in range(6))
    cov = jnp.stack(
        [jnp.stack([xx, xy, xz], axis=-1),
         jnp.stack([xy, yy, yz], axis=-1),
         jnp.stack([xz, yz, zz], axis=-1)], axis=-2)       # (n_pad, 3, 3) symmetric
    # TODO(synk): 3x3 symmetric eigendecomposition has no Pallas primitive; uses XLA eigh.
    _, eigvecs = jnp.linalg.eigh(cov)
    normal = eigvecs[..., :, 0]                            # smallest-eigenvalue eigenvector
    normal = normal / jnp.linalg.norm(normal, axis=-1, keepdims=True)
    normal = normal[:n]                                    # drop padded rows

    centre_points = jnp.mean(points, axis=0)               # (3,)
    centre_normals = jnp.mean(normal, axis=0)              # (3,)
    return centre_points, centre_normals


def read_data_forward(array_internal, array_sdf, array_inlet, fsup=1.0):
    """JAX/Pallas equivalent of Read_Data.forward (numpy files replaced by in-memory arrays)."""
    del fsup  # placeholder in the original module as well
    xsup, ysup = preprocess_internal(array_internal, array_sdf)
    x_inlet = array_inlet[:, 0:3].astype(jnp.float32)
    centre_inlet, normal_inlet = compute_normals(x_inlet, K_NEIGHBORS)
    simple_inlet = jnp.concatenate([centre_inlet, normal_inlet], axis=-1)   # (6,)
    X_sup = xsup[None].astype(jnp.float32)                 # (1, N_int, 4)
    Y_sup = ysup[None].astype(jnp.float32)                 # (1, N_int, C_int - 3)
    X_inlet = x_inlet[None].astype(jnp.float32)            # (1, N_inlet, 3)
    Simple_inlet = simple_inlet[None].astype(jnp.float32)  # (1, 6)
    return X_sup, Y_sup, X_inlet, Simple_inlet


# ----------------------------------------------------------------------------- main

if __name__ == "__main__":
    key = jax.random.PRNGKey(0)
    k1, k2, k3, k4 = jax.random.split(key, 4)

    N_INT, C_INT = 256, 8        # internal: [x, y, z, f0, f1(col 4, gets -0.5), f2, f3, f4]
    N_INLET = 64                 # inlet points

    # TODO(synk): file I/O (np.load of .npy cases) has no Pallas equivalent; synthetic data instead.
    array_internal = jax.random.normal(k1, (N_INT, C_INT), dtype=jnp.float32)
    array_sdf = jax.random.normal(k2, (N_INT, 4), dtype=jnp.float32)

    # inlet points: roughly planar patch (well-defined PCA normals) + small out-of-plane noise
    uv = jax.random.uniform(k3, (N_INLET, 2), dtype=jnp.float32)
    noise = 0.01 * jax.random.normal(k4, (N_INLET,), dtype=jnp.float32)
    e1 = jnp.array([1.0, 0.0, 0.0], jnp.float32)
    e2 = jnp.array([0.0, 1.0, 0.0], jnp.float32)
    nrm = jnp.array([0.0, 0.0, 1.0], jnp.float32)
    array_inlet = uv[:, 0:1] * e1 + uv[:, 1:2] * e2 + noise[:, None] * nrm   # (N_INLET, 3)

    X_sup, Y_sup, X_inlet, Simple_inlet = read_data_forward(
        array_internal, array_sdf, array_inlet, fsup=1.0)
    jax.block_until_ready((X_sup, Y_sup, X_inlet, Simple_inlet))

    assert X_sup.shape == (1, N_INT, 4) and X_sup.dtype == jnp.float32
    assert Y_sup.shape == (1, N_INT, C_INT - 3) and Y_sup.dtype == jnp.float32
    assert X_inlet.shape == (1, N_INLET, 3) and X_inlet.dtype == jnp.float32
    assert Simple_inlet.shape == (1, 6) and Simple_inlet.dtype == jnp.float32
    assert bool(jnp.all(jnp.isfinite(Simple_inlet)))
    print("KERNEL_OK")
</pallas_src>

<mosaic_0001>
module attributes {stable_mosaic.version = 11 : i64} {
  func.func @_preprocess_kernel(%arg0: i32, %arg1: memref<256x8xf32, #tpu.memory_space<vmem>>, %arg2: memref<256x4xf32, #tpu.memory_space<vmem>>, %arg3: memref<256x4xf32, #tpu.memory_space<vmem>>, %arg4: memref<256x5xf32, #tpu.memory_space<vmem>>) attributes {dimension_semantics = [#tpu.dimension_semantics<parallel>], iteration_bounds = array<i64: 1>, scalar_prefetch = 0 : i64, scratch_operands = 0 : i64, tpu.core_type = #tpu.core_type<tc>, window_params = [{transform_indices = @transform_0, window_bounds = array<i64: 256, 8>}, {transform_indices = @transform_1, window_bounds = array<i64: 256, 4>}, {transform_indices = @transform_2, window_bounds = array<i64: 256, 4>}, {transform_indices = @transform_3, window_bounds = array<i64: 256, 5>}]} {
    %c0 = arith.constant 0 : index
    %c0_0 = arith.constant 0 : index
    %0 = vector.load %arg1[%c0, %c0_0] : memref<256x8xf32, #tpu.memory_space<vmem>>, vector<256x8xf32>
    %c0_1 = arith.constant 0 : index
    %c0_2 = arith.constant 0 : index
    %1 = vector.load %arg2[%c0_1, %c0_2] : memref<256x4xf32, #tpu.memory_space<vmem>>, vector<256x4xf32>
    %2 = vector.extract_strided_slice %0 {offsets = [0, 0], sizes = [256, 3], strides = [1, 1]} : vector<256x8xf32> to vector<256x3xf32>
    %3 = vector.extract_strided_slice %1 {offsets = [0, 3], sizes = [256, 1], strides = [1, 1]} : vector<256x4xf32> to vector<256x1xf32>
    %4 = tpu.concatenate %2, %3 in 1 : vector<256x3xf32>, vector<256x1xf32> -> vector<256x4xf32>
    %c0_3 = arith.constant 0 : index
    %c0_4 = arith.constant 0 : index
    %5 = vector.load %arg3[%c0_3, %c0_4] : memref<256x4xf32, #tpu.memory_space<vmem>>, vector<256x4xf32>
    tpu.vector_store %arg3[%c0_3, %c0_4], %4 {strides = array<i32>} : memref<256x4xf32, #tpu.memory_space<vmem>>, vector<256x4xf32>,
    %6 = vector.extract_strided_slice %0 {offsets = [0, 3], sizes = [256, 1], strides = [1, 1]} : vector<256x8xf32> to vector<256x1xf32>
    %7 = vector.extract_strided_slice %0 {offsets = [0, 4], sizes = [256, 1], strides = [1, 1]} : vector<256x8xf32> to vector<256x1xf32>
    %cst = arith.constant 5.000000e-01 : f32
    %8 = vector.broadcast %cst : f32 to vector<256x1xf32>
    %9 = arith.subf %7, %8 : vector<256x1xf32>
    %10 = vector.extract_strided_slice %0 {offsets = [0, 5], sizes = [256, 3], strides = [1, 1]} : vector<256x8xf32> to vector<256x3xf32>
    %11 = tpu.concatenate %6, %9, %10 in 1 : vector<256x1xf32>, vector<256x1xf32>, vector<256x3xf32> -> vector<256x5xf32>
    %c0_5 = arith.constant 0 : index
    %c0_6 = arith.constant 0 : index
    %12 = vector.load %arg4[%c0_5, %c0_6] : memref<256x5xf32, #tpu.memory_space<vmem>>, vector<256x5xf32>
    tpu.vector_store %arg4[%c0_5, %c0_6], %11 {strides = array<i32>} : memref<256x5xf32, #tpu.memory_space<vmem>>, vector<256x5xf32>,
    return
  }
  func.func @transform_0(%arg0: i32) -> (i32, i32) {
    %c0_i32 = arith.constant 0 : i32
    %c0_i32_0 = arith.constant 0 : i32
    return %arg0, %c0_i32 : i32, i32
  }
  func.func @transform_1(%arg0: i32) -> (i32, i32) {
    %c0_i32 = arith.constant 0 : i32
    %c0_i32_0 = arith.constant 0 : i32
    return %arg0, %c0_i32 : i32, i32
  }
  func.func @transform_2(%arg0: i32) -> (i32, i32) {
    %c0_i32 = arith.constant 0 : i32
    %c0_i32_0 = arith.constant 0 : i32
    return %arg0, %c0_i32 : i32, i32
  }
  func.func @transform_3(%arg0: i32) -> (i32, i32) {
    %c0_i32 = arith.constant 0 : i32
    %c0_i32_0 = arith.constant 0 : i32
    return %arg0, %c0_i32 : i32, i32
  }
}

</mosaic_0001>

<llo_original>
// kernel: tpu_custom_call.1
$region0: #{tpu_custom_call.1}
  #allocation0 [shape = 'u32[]', space=smem, size = 0x4, offset = 0x4, fixed_abs, tag = 'smem constant byte address 0x4 - core index']
  #allocation1 [shape = 'u32[72,128]{1,0:T(1,128)}', space=vmem, size = 0x9000, scoped, tag = 'internal scratch']
  %s0 = inlined_call_operand.vmem [shape: f32[256,8], index: 0, kind: input, shape index: {}]
  %s1 = inlined_call_operand.vmem [shape: f32[256,4], index: 1, kind: input, shape index: {}]
  %s2 = inlined_call_operand.vmem [shape: f32[256,4], index: 2, kind: output, shape index: {0}]
  %s3 = inlined_call_operand.vmem [shape: f32[256,5], index: 3, kind: output, shape index: {1}]
  %4 = xla_tuple %s2, %s3
  %s5 = sld [smem:[#allocation0]]
  $region26: #{tpu_custom_call.1} parent=0
    _
  %s7 = ssub.s32 1, %s5
  %s8 = scalar_select 0, %s7, %s5
  // Predicated region
  $region2: #{tpu_custom_call.1} parent=0 // pred_check
    _
  $region3: #{tpu_custom_call.1} parent=0 // pred_check_branch
    %10 = sbr.rel (0) target = $region5
  $region4: #{tpu_custom_call.1} parent=0 // pred_region
    _
  $region5: #{tpu_custom_call.1} parent=0 // pred_fallthru
    _
  // Predicated region
  $region6: #{tpu_custom_call.1} parent=0 // pred_check
    _
  $region7: #{tpu_custom_call.1} parent=0 // pred_check_branch
    %12 = sbr.rel (0) target = $region9
  $region8: #{tpu_custom_call.1} parent=0 // pred_region
    _
  $region9: #{tpu_custom_call.1} parent=0 // pred_fallthru
    _
  %v13 = vld [vmem:[%s0] sm:$0xff]
  %v14 = vld [vmem:[%s0 + $0x8] sm:$0xff]
  %v15 = vld [vmem:[%s0 + $0x10] sm:$0xff]
  %v16 = vld [vmem:[%s0 + $0x18] sm:$0xff]
  %v17 = vld [vmem:[%s0 + $0x20] sm:$0xff]
  %v18 = vld [vmem:[%s0 + $0x28] sm:$0xff]
  %v19 = vld [vmem:[%s0 + $0x30] sm:$0xff]
  %v20 = vld [vmem:[%s0 + $0x38] sm:$0xff]
  %v21 = vld [vmem:[%s0 + $0x40] sm:$0xff]
  %v22 = vld [vmem:[%s0 + $0x48] sm:$0xff]
  %v23 = vld [vmem:[%s0 + $0x50] sm:$0xff]
  %v24 = vld [vmem:[%s0 + $0x58] sm:$0xff]
  %v25 = vld [vmem:[%s0 + $0x60] sm:$0xff]
  %v26 = vld [vmem:[%s0 + $0x68] sm:$0xff]
  %v27 = vld [vmem:[%s0 + $0x70] sm:$0xff]
  %v28 = vld [vmem:[%s0 + $0x78] sm:$0xff]
  %v29 = vld [vmem:[%s0 + $0x80] sm:$0xff]
  %v30 = vld [vmem:[%s0 + $0x88] sm:$0xff]
  %v31 = vld [vmem:[%s0 + $0x90] sm:$0xff]
  %v32 = vld [vmem:[%s0 + $0x98] sm:$0xff]
  %v33 = vld [vmem:[%s0 + $0xa0] sm:$0xff]
  %v34 = vld [vmem:[%s0 + $0xa8] sm:$0xff]
  %v35 = vld [vmem:[%s0 + $0xb0] sm:$0xff]
  %v36 = vld [vmem:[%s0 + $0xb8] sm:$0xff]
  %v37 = vld [vmem:[%s0 + $0xc0] sm:$0xff]
  %v38 = vld [vmem:[%s0 + $0xc8] sm:$0xff]
  %v39 = vld [vmem:[%s0 + $0xd0] sm:$0xff]
  %v40 = vld [vmem:[%s0 + $0xd8] sm:$0xff]
  %v41 = vld [vmem:[%s0 + $0xe0] sm:$0xff]
  %v42 = vld [vmem:[%s0 + $0xe8] sm:$0xff]
  %v43 = vld [vmem:[%s0 + $0xf0] sm:$0xff]
  %v44 = vld [vmem:[%s0 + $0xf8] sm:$0xff]
  %v45 = vld [vmem:[%s1] sm:$0xff]
  %v46 = vld [vmem:[%s1 + $0x8] sm:$0xff]
  %v47 = vld [vmem:[%s1 + $0x10] sm:$0xff]
  %v48 = vld [vmem:[%s1 + $0x18] sm:$0xff]
  %v49 = vld [vmem:[%s1 + $0x20] sm:$0xff]
  %v50 = vld [vmem:[%s1 + $0x28] sm:$0xff]
  %v51 = vld [vmem:[%s1 + $0x30] sm:$0xff]
  %v52 = vld [vmem:[%s1 + $0x38] sm:$0xff]
  %v53 = vld [vmem:[%s1 + $0x40] sm:$0xff]
  %v54 = vld [vmem:[%s1 + $0x48] sm:$0xff]
  %v55 = vld [vmem:[%s1 + $0x50] sm:$0xff]
  %v56 = vld [vmem:[%s1 + $0x58] sm:$0xff]
  %v57 = vld [vmem:[%s1 + $0x60] sm:$0xff]
  %v58 = vld [vmem:[%s1 + $0x68] sm:$0xff]
  %v59 = vld [vmem:[%s1 + $0x70] sm:$0xff]
  %v60 = vld [vmem:[%s1 + $0x78] sm:$0xff]
  %v61 = vld [vmem:[%s1 + $0x80] sm:$0xff]
  %v62 = vld [vmem:[%s1 + $0x88] sm:$0xff]
  %v63 = vld [vmem:[%s1 + $0x90] sm:$0xff]
  %v64 = vld [vmem:[%s1 + $0x98] sm:$0xff]
  %v65 = vld [vmem:[%s1 + $0xa0] sm:$0xff]
  %v66 = vld [vmem:[%s1 + $0xa8] sm:$0xff]
  %v67 = vld [vmem:[%s1 + $0xb0] sm:$0xff]
  %v68 = vld [vmem:[%s1 + $0xb8] sm:$0xff]
  %v69 = vld [vmem:[%s1 + $0xc0] sm:$0xff]
  %v70 = vld [vmem:[%s1 + $0xc8] sm:$0xff]
  %v71 = vld [vmem:[%s1 + $0xd0] sm:$0xff]
  %v72 = vld [vmem:[%s1 + $0xd8] sm:$0xff]
  %v73 = vld [vmem:[%s1 + $0xe0] sm:$0xff]
  %v74 = vld [vmem:[%s1 + $0xe8] sm:$0xff]
  %v75 = vld [vmem:[%s1 + $0xf0] sm:$0xff]
  %v76 = vld [vmem:[%s1 + $0xf8] sm:$0xff]
  %vm77 = vcmask 23552
  %v78 = vsel %vm77, %v13, %v45
  %v79 = vsel %vm77, %v14, %v46
  %v80 = vsel %vm77, %v15, %v47
  %v81 = vsel %vm77, %v16, %v48
  %v82 = vsel %vm77, %v17, %v49
  %v83 = vsel %vm77, %v18, %v50
  %v84 = vsel %vm77, %v19, %v51
  %v85 = vsel %vm77, %v20, %v52
  %v86 = vsel %vm77, %v21, %v53
  %v87 = vsel %vm77, %v22, %v54
  %v88 = vsel %vm77, %v23, %v55
  %v89 = vsel %vm77, %v24, %v56
  %v90 = vsel %vm77, %v25, %v57
  %v91 = vsel %vm77, %v26, %v58
  %v92 = vsel %vm77, %v27, %v59
  %v93 = vsel %vm77, %v28, %v60
  %v94 = vsel %vm77, %v29, %v61
  %v95 = vsel %vm77, %v30, %v62
  %v96 = vsel %vm77, %v31, %v63
  %v97 = vsel %vm77, %v32, %v64
  %v98 = vsel %vm77, %v33, %v65
  %v99 = vsel %vm77, %v34, %v66
  %v100 = vsel %vm77, %v35, %v67
  %v101 = vsel %vm77, %v36, %v68
  %v102 = vsel %vm77, %v37, %v69
  %v103 = vsel %vm77, %v38, %v70
  %v104 = vsel %vm77, %v39, %v71
  %v105 = vsel %vm77, %v40, %v72
  %v106 = vsel %vm77, %v41, %v73
  %v107 = vsel %vm77, %v42, %v74
  %v108 = vsel %vm77, %v43, %v75
  %v109 = vsel %vm77, %v44, %v76
  %vm110 = vcmask 31744
  %111 = vst.msk [vmem:[%s2] sm:$0xff] %vm110, %v78
  %112 = vst.msk [vmem:[%s2 + $0x8] sm:$0xff] %vm110, %v79
  %113 = vst.msk [vmem:[%s2 + $0x10] sm:$0xff] %vm110, %v80
  %114 = vst.msk [vmem:[%s2 + $0x18] sm:$0xff] %vm110, %v81
  %115 = vst.msk [vmem:[%s2 + $0x20] sm:$0xff] %vm110, %v82
  %116 = vst.msk [vmem:[%s2 + $0x28] sm:$0xff] %vm110, %v83
  %117 = vst.msk [vmem:[%s2 + $0x30] sm:$0xff] %vm110, %v84
  %118 = vst.msk [vmem:[%s2 + $0x38] sm:$0xff] %vm110, %v85
  %119 = vst.msk [vmem:[%s2 + $0x40] sm:$0xff] %vm110, %v86
  %120 = vst.msk [vmem:[%s2 + $0x48] sm:$0xff] %vm110, %v87
  %121 = vst.msk [vmem:[%s2 + $0x50] sm:$0xff] %vm110, %v88
  %122 = vst.msk [vmem:[%s2 + $0x58] sm:$0xff] %vm110, %v89
  %123 = vst.msk [vmem:[%s2 + $0x60] sm:$0xff] %vm110, %v90
  %124 = vst.msk [vmem:[%s2 + $0x68] sm:$0xff] %vm110, %v91
  %125 = vst.msk [vmem:[%s2 + $0x70] sm:$0xff] %vm110, %v92
  %126 = vst.msk [vmem:[%s2 + $0x78] sm:$0xff] %vm110, %v93
  %127 = vst.msk [vmem:[%s2 + $0x80] sm:$0xff] %vm110, %v94
  %128 = vst.msk [vmem:[%s2 + $0x88] sm:$0xff] %vm110, %v95
  %129 = vst.msk [vmem:[%s2 + $0x90] sm:$0xff] %vm110, %v96
  %130 = vst.msk [vmem:[%s2 + $0x98] sm:$0xff] %vm110, %v97
  %131 = vst.msk [vmem:[%s2 + $0xa0] sm:$0xff] %vm110, %v98
  %132 = vst.msk [vmem:[%s2 + $0xa8] sm:$0xff] %vm110, %v99
  %133 = vst.msk [vmem:[%s2 + $0xb0] sm:$0xff] %vm110, %v100
  %134 = vst.msk [vmem:[%s2 + $0xb8] sm:$0xff] %vm110, %v101
  %135 = vst.msk [vmem:[%s2 + $0xc0] sm:$0xff] %vm110, %v102
  %136 = vst.msk [vmem:[%s2 + $0xc8] sm:$0xff] %vm110, %v103
  %137 = vst.msk [vmem:[%s2 + $0xd0] sm:$0xff] %vm110, %v104
  %138 = vst.msk [vmem:[%s2 + $0xd8] sm:$0xff] %vm110, %v105
  %139 = vst.msk [vmem:[%s2 + $0xe0] sm:$0xff] %vm110, %v106
  %140 = vst.msk [vmem:[%s2 + $0xe8] sm:$0xff] %vm110, %v107
  %141 = vst.msk [vmem:[%s2 + $0xf0] sm:$0xff] %vm110, %v108
  %142 = vst.msk [vmem:[%s2 + $0xf8] sm:$0xff] %vm110, %v109
  %v143 = vsub.f32 %v13, 0.5
  %v144 = vsub.f32 %v14, 0.5
  %v145 = vsub.f32 %v15, 0.5
  %v146 = vsub.f32 %v16, 0.5
  %v147 = vsub.f32 %v17, 0.5
  %v148 = vsub.f32 %v18, 0.5
  %v149 = vsub.f32 %v19, 0.5
  %v150 = vsub.f32 %v20, 0.5
  %v151 = vsub.f32 %v21, 0.5
  %v152 = vsub.f32 %v22, 0.5
  %v153 = vsub.f32 %v23, 0.5
  %v154 = vsub.f32 %v24, 0.5
  %v155 = vsub.f32 %v25, 0.5
  %v156 = vsub.f32 %v26, 0.5
  %v157 = vsub.f32 %v27, 0.5
  %v158 = vsub.f32 %v28, 0.5
  %v159 = vsub.f32 %v29, 0.5
  %v160 = vsub.f32 %v30, 0.5
  %v161 = vsub.f32 %v31, 0.5
  %v162 = vsub.f32 %v32, 0.5
  %v163 = vsub.f32 %v33, 0.5
  %v164 = vsub.f32 %v34, 0.5
  %v165 = vsub.f32 %v35, 0.5
  %v166 = vsub.f32 %v36, 0.5
  %v167 = vsub.f32 %v37, 0.5
  %v168 = vsub.f32 %v38, 0.5
  %v169 = vsub.f32 %v39, 0.5
  %v170 = vsub.f32 %v40, 0.5
  %v171 = vsub.f32 %v41, 0.5
  %v172 = vsub.f32 %v42, 0.5
  %v173 = vsub.f32 %v43, 0.5
  %v174 = vsub.f32 %v44, 0.5
  %207 = vrot.lane.b32.xlu0 %v13, 125
  %v208 = vpop.permute.xlu0 %207
  %209 = vrot.lane.b32.xlu0 %v14, 125
  %v210 = vpop.permute.xlu0 %209
  %211 = vrot.lane.b32.xlu0 %v15, 125
  %v212 = vpop.permute.xlu0 %211
  %213 = vrot.lane.b32.xlu0 %v16, 125
  %v214 = vpop.permute.xlu0 %213
  %215 = vrot.lane.b32.xlu0 %v17, 125
  %v216 = vpop.permute.xlu0 %215
  %217 = vrot.lane.b32.xlu0 %v18, 125
  %v218 = vpop.permute.xlu0 %217
  %219 = vrot.lane.b32.xlu0 %v19, 125
  %v220 = vpop.permute.xlu0 %219
  %221 = vrot.lane.b32.xlu0 %v20, 125
  %v222 = vpop.permute.xlu0 %221
  %223 = vrot.lane.b32.xlu0 %v21, 125
  %v224 = vpop.permute.xlu0 %223
  %225 = vrot.lane.b32.xlu0 %v22, 125
  %v226 = vpop.permute.xlu0 %225
  %227 = vrot.lane.b32.xlu0 %v23, 125
  %v228 = vpop.permute.xlu0 %227
  %229 = vrot.lane.b32.xlu0 %v24, 125
  %v230 = vpop.permute.xlu0 %229
  %231 = vrot.lane.b32.xlu0 %v25, 125
  %v232 = vpop.permute.xlu0 %231
  %233 = vrot.lane.b32.xlu0 %v26, 125
  %v234 = vpop.permute.xlu0 %233
  %235 = vrot.lane.b32.xlu0 %v27, 125
  %v236 = vpop.permute.xlu0 %235
  %237 = vrot.lane.b32.xlu0 %v28, 125
  %v238 = vpop.permute.xlu0 %237
  %239 = vrot.lane.b32.xlu0 %v29, 125
  %v240 = vpop.permute.xlu0 %239
  %241 = vrot.lane.b32.xlu0 %v30, 125
  %v242 = vpop.permute.xlu0 %241
  %243 = vrot.lane.b32.xlu0 %v31, 125
  %v244 = vpop.permute.xlu0 %243
  %245 = vrot.lane.b32.xlu0 %v32, 125
  %v246 = vpop.permute.xlu0 %245
  %247 = vrot.lane.b32.xlu0 %v33, 125
  %v248 = vpop.permute.xlu0 %247
  %249 = vrot.lane.b32.xlu0 %v34, 125
  %v250 = vpop.permute.xlu0 %249
  %251 = vrot.lane.b32.xlu0 %v35, 125
  %v252 = vpop.permute.xlu0 %251
  %253 = vrot.lane.b32.xlu0 %v36, 125
  %v254 = vpop.permute.xlu0 %253
  %255 = vrot.lane.b32.xlu0 %v37, 125
  %v256 = vpop.permute.xlu0 %255
  %257 = vrot.lane.b32.xlu0 %v38, 125
  %v258 = vpop.permute.xlu0 %257
  %259 = vrot.lane.b32.xlu0 %v39, 125
  %v260 = vpop.permute.xlu0 %259
  %261 = vrot.lane.b32.xlu0 %v40, 125
  %v262 = vpop.permute.xlu0 %261
  %263 = vrot.lane.b32.xlu0 %v41, 125
  %v264 = vpop.permute.xlu0 %263
  %265 = vrot.lane.b32.xlu0 %v42, 125
  %v266 = vpop.permute.xlu0 %265
  %267 = vrot.lane.b32.xlu0 %v43, 125
  %v268 = vpop.permute.xlu0 %267
  %269 = vrot.lane.b32.xlu0 %v44, 125
  %v270 = vpop.permute.xlu0 %269
  %335 = vrot.lane.b32.xlu0 %v143, 125
  %v336 = vpop.permute.xlu0 %335
  %337 = vrot.lane.b32.xlu0 %v144, 125
  %v338 = vpop.permute.xlu0 %337
  %339 = vrot.lane.b32.xlu0 %v145, 125
  %v340 = vpop.permute.xlu0 %339
  %341 = vrot.lane.b32.xlu0 %v146, 125
  %v342 = vpop.permute.xlu0 %341
  %343 = vrot.lane.b32.xlu0 %v147, 125
  %v344 = vpop.permute.xlu0 %343
  %345 = vrot.lane.b32.xlu0 %v148, 125
  %v346 = vpop.permute.xlu0 %345
  %347 = vrot.lane.b32.xlu0 %v149, 125
  %v348 = vpop.permute.xlu0 %347
  %349 = vrot.lane.b32.xlu0 %v150, 125
  %v350 = vpop.permute.xlu0 %349
  %351 = vrot.lane.b32.xlu0 %v151, 125
  %v352 = vpop.permute.xlu0 %351
  %353 = vrot.lane.b32.xlu0 %v152, 125
  %v354 = vpop.permute.xlu0 %353
  %355 = vrot.lane.b32.xlu0 %v153, 125
  %v356 = vpop.permute.xlu0 %355
  %357 = vrot.lane.b32.xlu0 %v154, 125
  %v358 = vpop.permute.xlu0 %357
  %359 = vrot.lane.b32.xlu0 %v155, 125
  %v360 = vpop.permute.xlu0 %359
  %361 = vrot.lane.b32.xlu0 %v156, 125
  %v362 = vpop.permute.xlu0 %361
  %363 = vrot.lane.b32.xlu0 %v157, 125
  %v364 = vpop.permute.xlu0 %363
  %365 = vrot.lane.b32.xlu0 %v158, 125
  %v366 = vpop.permute.xlu0 %365
  %367 = vrot.lane.b32.xlu0 %v159, 125
  %v368 = vpop.permute.xlu0 %367
  %369 = vrot.lane.b32.xlu0 %v160, 125
  %v370 = vpop.permute.xlu0 %369
  %371 = vrot.lane.b32.xlu0 %v161, 125
  %v372 = vpop.permute.xlu0 %371
  %373 = vrot.lane.b32.xlu0 %v162, 125
  %v374 = vpop.permute.xlu0 %373
  %375 = vrot.lane.b32.xlu0 %v163, 125
  %v376 = vpop.permute.xlu0 %375
  %377 = vrot.lane.b32.xlu0 %v164, 125
  %v378 = vpop.permute.xlu0 %377
  %379 = vrot.lane.b32.xlu0 %v165, 125
  %v380 = vpop.permute.xlu0 %379
  %381 = vrot.lane.b32.xlu0 %v166, 125
  %v382 = vpop.permute.xlu0 %381
  %383 = vrot.lane.b32.xlu0 %v167, 125
  %v384 = vpop.permute.xlu0 %383
  %385 = vrot.lane.b32.xlu0 %v168, 125
  %v386 = vpop.permute.xlu0 %385
  %387 = vrot.lane.b32.xlu0 %v169, 125
  %v388 = vpop.permute.xlu0 %387
  %389 = vrot.lane.b32.xlu0 %v170, 125
  %v390 = vpop.permute.xlu0 %389
  %391 = vrot.lane.b32.xlu0 %v171, 125
  %v392 = vpop.permute.xlu0 %391
  %393 = vrot.lane.b32.xlu0 %v172, 125
  %v394 = vpop.permute.xlu0 %393
  %395 = vrot.lane.b32.xlu0 %v173, 125
  %v396 = vpop.permute.xlu0 %395
  %397 = vrot.lane.b32.xlu0 %v174, 125
  %v398 = vpop.permute.xlu0 %397
  %vm431 = vcmask 7168
  %v432 = vsel %vm431, %v208, %v336
  %v433 = vsel %vm431, %v210, %v338
  %v434 = vsel %vm431, %v212, %v340
  %v435 = vsel %vm431, %v214, %v342
  %v436 = vsel %vm431, %v216, %v344
  %v437 = vsel %vm431, %v218, %v346
  %v438 = vsel %vm431, %v220, %v348
  %v439 = vsel %vm431, %v222, %v350
  %v440 = vsel %vm431, %v224, %v352
  %v441 = vsel %vm431, %v226, %v354
  %v442 = vsel %vm431, %v228, %v356
  %v443 = vsel %vm431, %v230, %v358
  %v444 = vsel %vm431, %v232, %v360
  %v445 = vsel %vm431, %v234, %v362
  %v446 = vsel %vm431, %v236, %v364
  %v447 = vsel %vm431, %v238, %v366
  %v448 = vsel %vm431, %v240, %v368
  %v449 = vsel %vm431, %v242, %v370
  %v450 = vsel %vm431, %v244, %v372
  %v451 = vsel %vm431, %v246, %v374
  %v452 = vsel %vm431, %v248, %v376
  %v453 = vsel %vm431, %v250, %v378
  %v454 = vsel %vm431, %v252, %v380
  %v455 = vsel %vm431, %v254, %v382
  %v456 = vsel %vm431, %v256, %v384
  %v457 = vsel %vm431, %v258, %v386
  %v458 = vsel %vm431, %v260, %v388
  %v459 = vsel %vm431, %v262, %v390
  %v460 = vsel %vm431, %v264, %v392
  %v461 = vsel %vm431, %v266, %v394
  %v462 = vsel %vm431, %v268, %v396
  %v463 = vsel %vm431, %v270, %v398
  %vm464 = vcmask 15360
  %v465 = vsel %vm464, %v432, %v208
  %v466 = vsel %vm464, %v433, %v210
  %v467 = vsel %vm464, %v434, %v212
  %v468 = vsel %vm464, %v435, %v214
  %v469 = vsel %vm464, %v436, %v216
  %v470 = vsel %vm464, %v437, %v218
  %v471 = vsel %vm464, %v438, %v220
  %v472 = vsel %vm464, %v439, %v222
  %v473 = vsel %vm464, %v440, %v224
  %v474 = vsel %vm464, %v441, %v226
  %v475 = vsel %vm464, %v442, %v228
  %v476 = vsel %vm464, %v443, %v230
  %v477 = vsel %vm464, %v444, %v232
  %v478 = vsel %vm464, %v445, %v234
  %v479 = vsel %vm464, %v446, %v236
  %v480 = vsel %vm464, %v447, %v238
  %v481 = vsel %vm464, %v448, %v240
  %v482 = vsel %vm464, %v449, %v242
  %v483 = vsel %vm464, %v450, %v244
  %v484 = vsel %vm464, %v451, %v246
  %v485 = vsel %vm464, %v452, %v248
  %v486 = vsel %vm464, %v453, %v250
  %v487 = vsel %vm464, %v454, %v252
  %v488 = vsel %vm464, %v455, %v254
  %v489 = vsel %vm464, %v456, %v256
  %v490 = vsel %vm464, %v457, %v258
  %v491 = vsel %vm464, %v458, %v260
  %v492 = vsel %vm464, %v459, %v262
  %v493 = vsel %vm464, %v460, %v264
  %v494 = vsel %vm464, %v461, %v266
  %v495 = vsel %vm464, %v462, %v268
  %v496 = vsel %vm464, %v463, %v270
  %vm497 = vcmask 39936
  %498 = vst.msk [vmem:[%s3] sm:$0xff] %vm497, %v465
  %499 = vst.msk [vmem:[%s3 + $0x8] sm:$0xff] %vm497, %v466
  %500 = vst.msk [vmem:[%s3 + $0x10] sm:$0xff] %vm497, %v467
  %501 = vst.msk [vmem:[%s3 + $0x18] sm:$0xff] %vm497, %v468
  %502 = vst.msk [vmem:[%s3 + $0x20] sm:$0xff] %vm497, %v469
  %503 = vst.msk [vmem:[%s3 + $0x28] sm:$0xff] %vm497, %v470
  %504 = vst.msk [vmem:[%s3 + $0x30] sm:$0xff] %vm497, %v471
  %505 = vst.msk [vmem:[%s3 + $0x38] sm:$0xff] %vm497, %v472
  %506 = vst.msk [vmem:[%s3 + $0x40] sm:$0xff] %vm497, %v473
  %507 = vst.msk [vmem:[%s3 + $0x48] sm:$0xff] %vm497, %v474
  %508 = vst.msk [vmem:[%s3 + $0x50] sm:$0xff] %vm497, %v475
  %509 = vst.msk [vmem:[%s3 + $0x58] sm:$0xff] %vm497, %v476
  %510 = vst.msk [vmem:[%s3 + $0x60] sm:$0xff] %vm497, %v477
  %511 = vst.msk [vmem:[%s3 + $0x68] sm:$0xff] %vm497, %v478
  %512 = vst.msk [vmem:[%s3 + $0x70] sm:$0xff] %vm497, %v479
  %513 = vst.msk [vmem:[%s3 + $0x78] sm:$0xff] %vm497, %v480
  %514 = vst.msk [vmem:[%s3 + $0x80] sm:$0xff] %vm497, %v481
  %515 = vst.msk [vmem:[%s3 + $0x88] sm:$0xff] %vm497, %v482
  %516 = vst.msk [vmem:[%s3 + $0x90] sm:$0xff] %vm497, %v483
  %517 = vst.msk [vmem:[%s3 + $0x98] sm:$0xff] %vm497, %v484
  %518 = vst.msk [vmem:[%s3 + $0xa0] sm:$0xff] %vm497, %v485
  %519 = vst.msk [vmem:[%s3 + $0xa8] sm:$0xff] %vm497, %v486
  %520 = vst.msk [vmem:[%s3 + $0xb0] sm:$0xff] %vm497, %v487
  %521 = vst.msk [vmem:[%s3 + $0xb8] sm:$0xff] %vm497, %v488
  %522 = vst.msk [vmem:[%s3 + $0xc0] sm:$0xff] %vm497, %v489
  %523 = vst.msk [vmem:[%s3 + $0xc8] sm:$0xff] %vm497, %v490
  %524 = vst.msk [vmem:[%s3 + $0xd0] sm:$0xff] %vm497, %v491
  %525 = vst.msk [vmem:[%s3 + $0xd8] sm:$0xff] %vm497, %v492
  %526 = vst.msk [vmem:[%s3 + $0xe0] sm:$0xff] %vm497, %v493
  %527 = vst.msk [vmem:[%s3 + $0xe8] sm:$0xff] %vm497, %v494
  %528 = vst.msk [vmem:[%s3 + $0xf0] sm:$0xff] %vm497, %v495
  %529 = vst.msk [vmem:[%s3 + $0xf8] sm:$0xff] %vm497, %v496
  // Predicated region
  $region10: #{tpu_custom_call.1} parent=0 // pred_check
    _
  $region11: #{tpu_custom_call.1} parent=0 // pred_check_branch
    %531 = sbr.rel (0) target = $region13
  $region12: #{tpu_custom_call.1} parent=0 // pred_region
    _
  $region13: #{tpu_custom_call.1} parent=0 // pred_fallthru
    _
  // Predicated region
  $region14: #{tpu_custom_call.1} parent=0 // pred_check
    _
  $region15: #{tpu_custom_call.1} parent=0 // pred_check_branch
    %533 = sbr.rel (0) target = $region17
  $region16: #{tpu_custom_call.1} parent=0 // pred_region
    _
  $region17: #{tpu_custom_call.1} parent=0 // pred_fallthru
    _
  // Predicated region
  $region18: #{tpu_custom_call.1} parent=0 // pred_check
    _
  $region19: #{tpu_custom_call.1} parent=0 // pred_check_branch
    %535 = sbr.rel (0) target = $region21
  $region20: #{tpu_custom_call.1} parent=0 // pred_region
    _
  $region21: #{tpu_custom_call.1} parent=0 // pred_fallthru
    _
  // Predicated region
  $region22: #{tpu_custom_call.1} parent=0 // pred_check
    _
  $region23: #{tpu_custom_call.1} parent=0 // pred_check_branch
    %537 = sbr.rel (0) target = $region25
  $region24: #{tpu_custom_call.1} parent=0 // pred_region
    _
  $region25: #{tpu_custom_call.1} parent=0 // pred_fallthru
    _

</llo_original>
